<compile_context>
chip_gen: v5e
topology: v5e:2x2
jax: 0.10.0
libtpu: 0.0.40
codegen_flags: <defaults>
</compile_context>

<pallas_src>
import math

import jax
import jax.numpy as jnp
import numpy as np
from jax.experimental import pallas as pl
from jax.experimental.pallas import tpu as pltpu

SPATIAL = (9, 11, 9)          # hard-coded by the module (891 = 9*11*9)
S_TOTAL = SPATIAL[0] * SPATIAL[1] * SPATIAL[2]


def _channel_cluster_kernel(x_ref, w1t_ref, b1_ref, w2t_ref, b2_ref, g_ref, wf_ref):
    # x_ref:   (Bt, C, S)    native channels-first tile (lane axis = spatial, dense)
    # w1t_ref: (C, H)        fc1 weight, transposed
    # b1_ref:  (1, H)
    # w2t_ref: (H, P*C)      fc2 weight, transposed (one matmul for all parts)
    # b2_ref:  (1, P*C)
    # g_ref:   (Bt, 1, P*C)  flat grouping result (lane-dense, 128-wide rows)
    # wf_ref:  (Bt, P, S)    weighted feature (flattened spatial)
    Bt, C, S = x_ref.shape
    P = wf_ref.shape[1]

    # --- global average pool over all spatial positions (lane reduce on XLU) ---
    pooled = jnp.sum(x_ref[...], axis=-1) * (1.0 / S)          # (Bt, C)

    # --- fc1 + sigmoid (one small MXU matmul for the whole batch tile) ---
    h = jax.nn.sigmoid(
        jnp.dot(pooled, w1t_ref[...], preferred_element_type=jnp.float32)
        + b1_ref[...])                                         # (Bt, H)

    # --- fc2 + sigmoid: single (Bt,H)@(H,P*C) matmul; P*C = one dense lane row ---
    g_flat = jax.nn.sigmoid(
        jnp.dot(h, w2t_ref[...], preferred_element_type=jnp.float32)
        + b2_ref[...])                                         # (Bt, P*C)
    g_ref[:, 0, :] = g_flat.astype(g_ref.dtype)

    # fold the 1/C channel-average into g (scales P*C elements, not P*S)
    g_scaled = g_flat * (1.0 / C)                              # (Bt, P*C)

    # --- weighted feature: wf[b, p, s] = sum_c g_scaled[b, p*C + c] * x[b, c, s] ---
    # Bt is small & static: per-b 2-D matmuls keep everything in proven MXU shapes.
    for b in range(Bt):
        gb = jnp.concatenate(
            [g_scaled[b:b + 1, p * C:(p + 1) * C] for p in range(P)],
            axis=0)                                            # (P, C)
        wf_b = jnp.dot(gb, x_ref[b], preferred_element_type=jnp.float32)   # (P, S)
        wf_ref[b] = wf_b.astype(wf_ref.dtype)


def _pick_batch_tile(B, max_bt=8):
    """Largest divisor of B that is <= max_bt, keeping >= 2 grid steps when B >= 2
    (so both v7x TensorCores get work) and a small (~Bt * 230 KB) VMEM footprint."""
    if B <= 1:
        return 1
    limit = max(1, min(max_bt, B // 2))
    for bt in range(limit, 0, -1):
        if B % bt == 0:
            return bt
    return 1


def channel_cluster_forward(x, params, part_num):
    """x: (B, C, 9, 11, 9) float32.  params: (W1, b1, W2, b2) in PyTorch layout."""
    W1, b1, W2, b2 = params
    B, C = x.shape[0], x.shape[1]
    S = x.shape[2] * x.shape[3] * x.shape[4]
    assert S == S_TOTAL, "module hard-codes 891 spatial positions"
    P = part_num
    H = W1.shape[0]
    assert H == (C * P) // 2

    # ---- glue: no HBM relayout of x (row-major reshape is free) ----
    x_cs = x.reshape(B, C, S)                                  # (B, C, S)
    w1t = W1.T                                                 # (C, H)
    b1r = b1.reshape(1, H)
    w2t = W2.T                                                 # (H, P*C)
    b2r = b2.reshape(1, P * C)

    Bt = _pick_batch_tile(B)
    grid = (B // Bt,)

    g_flat, wf = pl.pallas_call(
        _channel_cluster_kernel,
        out_shape=(jax.ShapeDtypeStruct((B, 1, P * C), x.dtype),
                   jax.ShapeDtypeStruct((B, P, S), x.dtype)),
        grid_spec=pltpu.PrefetchScalarGridSpec(
            num_scalar_prefetch=0,
            grid=grid,
            in_specs=[
                pl.BlockSpec((Bt, C, S), lambda i: (i, 0, 0)),      # x
                pl.BlockSpec((C, H), lambda i: (0, 0)),             # W1^T
                pl.BlockSpec((1, H), lambda i: (0, 0)),             # b1
                pl.BlockSpec((H, P * C), lambda i: (0, 0)),         # W2^T
                pl.BlockSpec((1, P * C), lambda i: (0, 0)),         # b2
            ],
            out_specs=[
                pl.BlockSpec((Bt, 1, P * C), lambda i: (i, 0, 0)),  # g (lane-dense)
                pl.BlockSpec((Bt, P, S), lambda i: (i, 0, 0)),      # wf
            ],
        ),
        compiler_params=pltpu.CompilerParams(
            dimension_semantics=("parallel",)),
    )(x_cs, w1t, b1r, w2t, b2r)

    g = g_flat.reshape(B, P, C)
    return g, wf.reshape(B, P, *SPATIAL)


def reference_forward(x, params, part_num):
    """Pure-JAX reference mirroring the PyTorch forward."""
    W1, b1, W2, b2 = params
    B, C = x.shape[0], x.shape[1]
    P = part_num
    xflat = x.reshape(B, C, -1)                                # (B, C, 891)
    pooled = xflat.mean(axis=2)                                # (B, C)
    h = jax.nn.sigmoid(pooled @ W1.T + b1)                     # (B, H)
    gflat = jax.nn.sigmoid(h @ W2.T + b2)                      # (B, P*C)
    g = gflat.reshape(B, P, C)                                 # unfold(-1, C, C)
    wf = jnp.einsum('bpc,bcs->bps', g, xflat) / C              # adaptive pool over C
    return g, wf.reshape(B, P, *SPATIAL)


if __name__ == "__main__":
    # small, deterministic problem size
    B, C, P = 2, 32, 4
    H = (C * P) // 2

    key = jax.random.PRNGKey(0)
    k1, k2, k3, k4, k5 = jax.random.split(key, 5)

    # deterministic PyTorch-style Linear init (uniform +/- 1/sqrt(fan_in))
    bound1 = 1.0 / math.sqrt(C)
    W1 = jax.random.uniform(k1, (H, C), jnp.float32, -bound1, bound1)
    b1 = jax.random.uniform(k2, (H,), jnp.float32, -bound1, bound1)
    bound2 = 1.0 / math.sqrt(H)
    W2 = jax.random.uniform(k3, (P * C, H), jnp.float32, -bound2, bound2)
    b2 = jax.random.uniform(k4, (P * C,), jnp.float32, -bound2, bound2)
    params = (W1, b1, W2, b2)

    x = jax.random.normal(k5, (B, C, *SPATIAL), jnp.float32)

    g, wf = channel_cluster_forward(x, params, P)
    g = jax.block_until_ready(g)
    wf = jax.block_until_ready(wf)

    g_ref, wf_ref = reference_forward(x, params, P)
    np.testing.assert_allclose(np.asarray(g), np.asarray(g_ref), rtol=1e-4, atol=1e-4)
    np.testing.assert_allclose(np.asarray(wf), np.asarray(wf_ref), rtol=1e-4, atol=1e-4)

    assert g.shape == (B, P, C)
    assert wf.shape == (B, P, *SPATIAL)
    print("KERNEL_OK")
</pallas_src>

<mosaic_0001>
module attributes {stable_mosaic.version = 11 : i64} {
  func.func @_channel_cluster_kernel(%arg0: i32, %arg1: memref<1x32x891xf32, #tpu.memory_space<vmem>>, %arg2: memref<32x64xf32, #tpu.memory_space<vmem>>, %arg3: memref<1x64xf32, #tpu.memory_space<vmem>>, %arg4: memref<64x128xf32, #tpu.memory_space<vmem>>, %arg5: memref<1x128xf32, #tpu.memory_space<vmem>>, %arg6: memref<1x1x128xf32, #tpu.memory_space<vmem>>, %arg7: memref<1x4x891xf32, #tpu.memory_space<vmem>>) attributes {dimension_semantics = [#tpu.dimension_semantics<parallel>], iteration_bounds = array<i64: 2>, scalar_prefetch = 0 : i64, scratch_operands = 0 : i64, tpu.core_type = #tpu.core_type<tc>, window_params = [{transform_indices = @transform_0, window_bounds = array<i64: 1, 32, 891>}, {pipeline_mode = #tpu.pipeline_mode<synchronous>, transform_indices = @transform_1, window_bounds = array<i64: 32, 64>}, {pipeline_mode = #tpu.pipeline_mode<synchronous>, transform_indices = @transform_2, window_bounds = array<i64: 1, 64>}, {pipeline_mode = #tpu.pipeline_mode<synchronous>, transform_indices = @transform_3, window_bounds = array<i64: 64, 128>}, {pipeline_mode = #tpu.pipeline_mode<synchronous>, transform_indices = @transform_4, window_bounds = array<i64: 1, 128>}, {transform_indices = @transform_5, window_bounds = array<i64: 1, 1, 128>}, {transform_indices = @transform_6, window_bounds = array<i64: 1, 4, 891>}]} {
    %c0 = arith.constant 0 : index
    %c0_0 = arith.constant 0 : index
    %c0_1 = arith.constant 0 : index
    %0 = vector.load %arg1[%c0, %c0_0, %c0_1] : memref<1x32x891xf32, #tpu.memory_space<vmem>>, vector<1x32x891xf32>
    %cst = arith.constant dense<0.000000e+00> : vector<1x32xf32>
    %1 = vector.multi_reduction <add>, %0, %cst [2] : vector<1x32x891xf32> to vector<1x32xf32>
    %cst_2 = arith.constant 0.00112233451 : f32
    %2 = vector.broadcast %cst_2 : f32 to vector<1x32xf32>
    %3 = arith.mulf %1, %2 : vector<1x32xf32>
    %c0_3 = arith.constant 0 : index
    %c0_4 = arith.constant 0 : index
    %4 = vector.load %arg2[%c0_3, %c0_4] : memref<32x64xf32, #tpu.memory_space<vmem>>, vector<32x64xf32>
    %cst_5 = arith.constant dense<0.000000e+00> : vector<1x64xf32>
    %5 = tpu.matmul %3, %4, %cst_5 {dimension_numbers = #tpu.dot_dimension_numbers<[1], [0], [0], [1], [0, 0, 1, 1], [], []>} : vector<1x32xf32>, vector<32x64xf32>, vector<1x64xf32> -> vector<1x64xf32>
    %c0_6 = arith.constant 0 : index
    %c0_7 = arith.constant 0 : index
    %6 = vector.load %arg3[%c0_6, %c0_7] : memref<1x64xf32, #tpu.memory_space<vmem>>, vector<1x64xf32>
    %7 = arith.addf %5, %6 : vector<1x64xf32>
    %8 = arith.negf %7 : vector<1x64xf32>
    %9 = math.exp %8 : vector<1x64xf32>
    %cst_8 = arith.constant 1.000000e+00 : f32
    %10 = vector.broadcast %cst_8 : f32 to vector<1x64xf32>
    %11 = arith.addf %10, %9 : vector<1x64xf32>
    %12 = arith.divf %10, %11 : vector<1x64xf32>
    %c0_9 = arith.constant 0 : index
    %c0_10 = arith.constant 0 : index
    %13 = vector.load %arg4[%c0_9, %c0_10] : memref<64x128xf32, #tpu.memory_space<vmem>>, vector<64x128xf32>
    %cst_11 = arith.constant dense<0.000000e+00> : vector<1x128xf32>
    %14 = tpu.matmul %12, %13, %cst_11 {dimension_numbers = #tpu.dot_dimension_numbers<[1], [0], [0], [1], [0, 0, 1, 1], [], []>} : vector<1x64xf32>, vector<64x128xf32>, vector<1x128xf32> -> vector<1x128xf32>
    %c0_12 = arith.constant 0 : index
    %c0_13 = arith.constant 0 : index
    %15 = vector.load %arg5[%c0_12, %c0_13] : memref<1x128xf32, #tpu.memory_space<vmem>>, vector<1x128xf32>
    %16 = arith.addf %14, %15 : vector<1x128xf32>
    %17 = arith.negf %16 : vector<1x128xf32>
    %18 = math.exp %17 : vector<1x128xf32>
    %cst_14 = arith.constant 1.000000e+00 : f32
    %19 = vector.broadcast %cst_14 : f32 to vector<1x128xf32>
    %20 = arith.addf %19, %18 : vector<1x128xf32>
    %21 = arith.divf %19, %20 : vector<1x128xf32>
    %c0_15 = arith.constant 0 : index
    %c0_16 = arith.constant 0 : index
    %c0_17 = arith.constant 0 : index
    %22 = vector.load %arg6[%c0_15, %c0_16, %c0_17] : memref<1x1x128xf32, #tpu.memory_space<vmem>>, vector<1x1x128xf32>
    %23 = vector.shape_cast %22 : vector<1x1x128xf32> to vector<1x128xf32>
    %24 = vector.shape_cast %21 : vector<1x128xf32> to vector<1x1x128xf32>
    tpu.vector_store %arg6[%c0_15, %c0_16, %c0_17], %24 {strides = array<i32>} : memref<1x1x128xf32, #tpu.memory_space<vmem>>, vector<1x1x128xf32>,
    %cst_18 = arith.constant 3.125000e-02 : f32
    %25 = vector.broadcast %cst_18 : f32 to vector<1x128xf32>
    %26 = arith.mulf %21, %25 : vector<1x128xf32>
    %27 = vector.extract_strided_slice %26 {offsets = [0, 0], sizes = [1, 32], strides = [1, 1]} : vector<1x128xf32> to vector<1x32xf32>
    %28 = vector.extract_strided_slice %26 {offsets = [0, 32], sizes = [1, 32], strides = [1, 1]} : vector<1x128xf32> to vector<1x32xf32>
    %29 = vector.extract_strided_slice %26 {offsets = [0, 64], sizes = [1, 32], strides = [1, 1]} : vector<1x128xf32> to vector<1x32xf32>
    %30 = vector.extract_strided_slice %26 {offsets = [0, 96], sizes = [1, 32], strides = [1, 1]} : vector<1x128xf32> to vector<1x32xf32>
    %31 = tpu.concatenate %27, %28, %29, %30 in 0 : vector<1x32xf32>, vector<1x32xf32>, vector<1x32xf32>, vector<1x32xf32> -> vector<4x32xf32>
    %c0_19 = arith.constant 0 : index
    %c0_20 = arith.constant 0 : index
    %c0_21 = arith.constant 0 : index
    %32 = vector.load %arg1[%c0_19, %c0_20, %c0_21] : memref<1x32x891xf32, #tpu.memory_space<vmem>>, vector<1x32x891xf32>
    %33 = vector.shape_cast %32 : vector<1x32x891xf32> to vector<32x891xf32>
    %cst_22 = arith.constant dense<0.000000e+00> : vector<4x891xf32>
    %34 = tpu.matmul %31, %33, %cst_22 {dimension_numbers = #tpu.dot_dimension_numbers<[1], [0], [0], [1], [0, 0, 1, 1], [], []>} : vector<4x32xf32>, vector<32x891xf32>, vector<4x891xf32> -> vector<4x891xf32>
    %c0_23 = arith.constant 0 : index
    %c0_24 = arith.constant 0 : index
    %c0_25 = arith.constant 0 : index
    %35 = vector.load %arg7[%c0_23, %c0_24, %c0_25] : memref<1x4x891xf32, #tpu.memory_space<vmem>>, vector<1x4x891xf32>
    %36 = vector.shape_cast %35 : vector<1x4x891xf32> to vector<4x891xf32>
    %37 = vector.shape_cast %34 : vector<4x891xf32> to vector<1x4x891xf32>
    tpu.vector_store %arg7[%c0_23, %c0_24, %c0_25], %37 {strides = array<i32>} : memref<1x4x891xf32, #tpu.memory_space<vmem>>, vector<1x4x891xf32>,
    return
  }
  func.func @transform_0(%arg0: i32) -> (i32, i32, i32) {
    %c0_i32 = arith.constant 0 : i32
    %c0_i32_0 = arith.constant 0 : i32
    %c0_i32_1 = arith.constant 0 : i32
    return %arg0, %c0_i32, %c0_i32_0 : i32, i32, i32
  }
  func.func @transform_1(%arg0: i32) -> (i32, i32) {
    %c0_i32 = arith.constant 0 : i32
    %c0_i32_0 = arith.constant 0 : i32
    %c0_i32_1 = arith.constant 0 : i32
    return %c0_i32, %c0_i32_0 : i32, i32
  }
  func.func @transform_2(%arg0: i32) -> (i32, i32) {
    %c0_i32 = arith.constant 0 : i32
    %c0_i32_0 = arith.constant 0 : i32
    %c0_i32_1 = arith.constant 0 : i32
    return %c0_i32, %c0_i32_0 : i32, i32
  }
  func.func @transform_3(%arg0: i32) -> (i32, i32) {
    %c0_i32 = arith.constant 0 : i32
    %c0_i32_0 = arith.constant 0 : i32
    %c0_i32_1 = arith.constant 0 : i32
    return %c0_i32, %c0_i32_0 : i32, i32
  }
  func.func @transform_4(%arg0: i32) -> (i32, i32) {
    %c0_i32 = arith.constant 0 : i32
    %c0_i32_0 = arith.constant 0 : i32
    %c0_i32_1 = arith.constant 0 : i32
    return %c0_i32, %c0_i32_0 : i32, i32
  }
  func.func @transform_5(%arg0: i32) -> (i32, i32, i32) {
    %c0_i32 = arith.constant 0 : i32
    %c0_i32_0 = arith.constant 0 : i32
    %c0_i32_1 = arith.constant 0 : i32
    return %arg0, %c0_i32, %c0_i32_0 : i32, i32, i32
  }
  func.func @transform_6(%arg0: i32) -> (i32, i32, i32) {
    %c0_i32 = arith.constant 0 : i32
    %c0_i32_0 = arith.constant 0 : i32
    %c0_i32_1 = arith.constant 0 : i32
    return %arg0, %c0_i32, %c0_i32_0 : i32, i32, i32
  }
}

</mosaic_0001>

<llo_original>
// kernel: tpu_custom_call.1
$region0: #{tpu_custom_call.1}
  #allocation0 [shape = 'u32[]', space=smem, size = 0x4, offset = 0x4, fixed_abs, tag = 'smem constant byte address 0x4 - core index']
  #allocation1 [shape = 'u32[72,128]{1,0:T(1,128)}', space=vmem, size = 0x9000, scoped, tag = 'internal scratch']
  %s0 = inlined_call_operand.hbm [shape: f32[2,32,891], index: 0, kind: input, shape index: {}]
  %s1 = inlined_call_operand.hbm [shape: f32[32,64], index: 1, kind: input, shape index: {}]
  %s2 = inlined_call_operand.vmem [shape: f32[1,64], index: 2, kind: input, shape index: {}]
  %s3 = inlined_call_operand.hbm [shape: f32[64,128], index: 3, kind: input, shape index: {}]
  %s4 = inlined_call_operand.vmem [shape: f32[1,128], index: 4, kind: input, shape index: {}]
  %s5 = inlined_call_operand.hbm [shape: f32[2,1,128], index: 5, kind: output, shape index: {0}]
  %s6 = inlined_call_operand.hbm [shape: f32[2,4,891], index: 6, kind: output, shape index: {1}]
  %7 = xla_tuple %s5, %s6
  %s8 = sld [smem:[#allocation0]]
  $region73: #{tpu_custom_call.1} parent=0
    _
  %s10 = ssub.s32 1, %s8
  %s11 = scalar_select 0, %s10, %s8
  $region1: #{tpu_custom_call.1} parent=0
    #allocation2 [shape = 'u8[229376]{0}', space=vmem, size = 0x38000, scoped, tag = 'input window, operand 0']
    #allocation3 [shape = 's32[2]{0}', space=sflag, size = 0x8, scoped, tag = 'scoped memory for tpu_custom_call.1']
    #allocation4 [shape = 's32[2]{0}', space=sflag, size = 0x8, scoped, tag = 'scoped memory for tpu_custom_call.1']
    #allocation5 [shape = 'u8[16384]{0}', space=vmem, size = 0x4000, scoped, tag = 'input window, operand 1, single buffered']
    #allocation6 [shape = 's32[1]{0}', space=sflag, size = 0x4, scoped, tag = 'scoped memory for tpu_custom_call.1']
    #allocation7 [shape = 'u8[32768]{0}', space=vmem, size = 0x8000, scoped, tag = 'input window, operand 3, single buffered']
    #allocation8 [shape = 'u8[1024]{0}', space=vmem, size = 0x400, scoped, tag = 'output window, operand 0']
    #allocation9 [shape = 'u8[28672]{0}', space=vmem, size = 0x7000, scoped, tag = 'output window, operand 1']
    #allocation10 [shape = 's32[2]{0}', space=sflag, size = 0x8, scoped, tag = 'scoped memory for tpu_custom_call.1']
    %12 = vsyncpa [#allocation3], 0
    %s13 = scalar_lea.sflag [#allocation3], 1
    %14 = vsyncpa %s13, 0
    %15 = vsyncpa [#allocation6], 0
    %16 = vsyncpa [#allocation4], 0
    %s17 = scalar_lea.sflag [#allocation4], 1
    %18 = vsyncpa %s17, 0
    %19 = vsyncpa [#allocation10], 0
    %s20 = scalar_lea.sflag [#allocation10], 1
    %21 = vsyncpa %s20, 0
    loop: start=0, step=1, limit=4
    $region2: #{tpu_custom_call.1} parent=1 // loop_pre_header
      _
    $region3: #{tpu_custom_call.1} parent=1 // loop_header
      %s23 = sphi 0, %s27
      %p24 = scmp.ge.s32.totalorder %s23, 4
      %s33 = sphi 0, %s35
      %s36 = sphi 0, %s33
      %s37 = sphi 0, %s36
      %s53 = sphi 0, %s37
      %s57 = sphi 0, %s57
      %s59 = sphi 0, %s57
      %s60 = sphi 0, %s59
      %s74 = sphi 0, %s60
      %s78 = sphi 0, %s78
      %s80 = sphi 0, %s78
      %s81 = sphi 0, %s80
      %s95 = sphi 0, %s81
      %s99 = sphi 0, %s99
      %s101 = sphi 0, %s99
      %s102 = sphi 0, %s101
      %s116 = sphi 0, %s102
      %s120 = sphi 0, %s120
      %s122 = sphi 0, %s120
      %s123 = sphi 0, %s122
      %s137 = sphi 0, %s123
      %s143 = sphi 0, %s145
      %s146 = sphi 0, %s143
      %s147 = sphi 0, %s146
      %s163 = sphi 0, %s147
      %s169 = sphi 0, %s171
      %s172 = sphi 0, %s169
      %s173 = sphi 0, %s172
      %s189 = sphi 0, %s173
    $region4: #{tpu_custom_call.1} parent=1 // loop_header_branch
      %26 = sbr.rel (%p24) target = $region8
    $region5: #{tpu_custom_call.1} parent=1 // loop_body
      %s28 = ssub.s32 %s23, 1
      %s29 = ssub.s32 %s23, 2
      %s30 = sadd.s32 %s23, 1
      %s31 = ssub.s32 %s23, %s30
      %p32 = scmp.eq.s32.totalorder %s31, 0
      %s34 = sadd.s32 %s33, 1
      %s35 = scalar_select %p32, %s33, %s34
      %p38 = pneg %p32
      %p39 = scmp.eq.s32.totalorder %s23, 1
      %p40 = por %p38, %p39
      %p41 = scmp.ne.s32.totalorder %s33, %s36
      %p42 = scmp.eq.s32.totalorder %s23, 0
      %p43 = por %p41, %p42
      %p44 = scmp.ne.s32.totalorder %s33, %s36
      %p45 = scmp.eq.s32.totalorder %s28, 1
      %p46 = por %p44, %p45
      %p47 = scmp.ne.s32.totalorder %s36, %s37
      %p48 = scmp.eq.s32.totalorder %s28, 0
      %p49 = por %p47, %p48
      %p50 = scmp.ne.s32.totalorder %s36, %s37
      %p51 = scmp.eq.s32.totalorder %s29, 1
      %p52 = por %p50, %p51
      %p54 = scmp.ne.s32.totalorder %s37, %s53
      %p55 = scmp.eq.s32.totalorder %s29, 0
      %p56 = por %p54, %p55
      %s58 = sadd.s32 %s57, 1
      %p61 = scmp.eq.s32.totalorder %s23, 1
      %p62 = scmp.ne.s32.totalorder %s57, %s59
      %p63 = scmp.eq.s32.totalorder %s23, 0
      %p64 = por %p62, %p63
      %p65 = scmp.ne.s32.totalorder %s57, %s59
      %p66 = scmp.eq.s32.totalorder %s28, 1
      %p67 = por %p65, %p66
      %p68 = scmp.ne.s32.totalorder %s59, %s60
      %p69 = scmp.eq.s32.totalorder %s28, 0
      %p70 = por %p68, %p69
      %p71 = scmp.ne.s32.totalorder %s59, %s60
      %p72 = scmp.eq.s32.totalorder %s29, 1
      %p73 = por %p71, %p72
      %p75 = scmp.ne.s32.totalorder %s60, %s74
      %p76 = scmp.eq.s32.totalorder %s29, 0
      %p77 = por %p75, %p76
      %s79 = sadd.s32 %s78, 1
      %p82 = scmp.eq.s32.totalorder %s23, 1
      %p83 = scmp.ne.s32.totalorder %s78, %s80
      %p84 = scmp.eq.s32.totalorder %s23, 0
      %p85 = por %p83, %p84
      %p86 = scmp.ne.s32.totalorder %s78, %s80
      %p87 = scmp.eq.s32.totalorder %s28, 1
      %p88 = por %p86, %p87
      %p89 = scmp.ne.s32.totalorder %s80, %s81
      %p90 = scmp.eq.s32.totalorder %s28, 0
      %p91 = por %p89, %p90
      %p92 = scmp.ne.s32.totalorder %s80, %s81
      %p93 = scmp.eq.s32.totalorder %s29, 1
      %p94 = por %p92, %p93
      %p96 = scmp.ne.s32.totalorder %s81, %s95
      %p97 = scmp.eq.s32.totalorder %s29, 0
      %p98 = por %p96, %p97
      %s100 = sadd.s32 %s99, 1
      %p103 = scmp.eq.s32.totalorder %s23, 1
      %p104 = scmp.ne.s32.totalorder %s99, %s101
      %p105 = scmp.eq.s32.totalorder %s23, 0
      %p106 = por %p104, %p105
      %p107 = scmp.ne.s32.totalorder %s99, %s101
      %p108 = scmp.eq.s32.totalorder %s28, 1
      %p109 = por %p107, %p108
      %p110 = scmp.ne.s32.totalorder %s101, %s102
      %p111 = scmp.eq.s32.totalorder %s28, 0
      %p112 = por %p110, %p111
      %p113 = scmp.ne.s32.totalorder %s101, %s102
      %p114 = scmp.eq.s32.totalorder %s29, 1
      %p115 = por %p113, %p114
      %p117 = scmp.ne.s32.totalorder %s102, %s116
      %p118 = scmp.eq.s32.totalorder %s29, 0
      %p119 = por %p117, %p118
      %s121 = sadd.s32 %s120, 1
      %p124 = scmp.eq.s32.totalorder %s23, 1
      %p125 = scmp.ne.s32.totalorder %s120, %s122
      %p126 = scmp.eq.s32.totalorder %s23, 0
      %p127 = por %p125, %p126
      %p128 = scmp.ne.s32.totalorder %s120, %s122
      %p129 = scmp.eq.s32.totalorder %s28, 1
      %p130 = por %p128, %p129
      %p131 = scmp.ne.s32.totalorder %s122, %s123
      %p132 = scmp.eq.s32.totalorder %s28, 0
      %p133 = por %p131, %p132
      %p134 = scmp.ne.s32.totalorder %s122, %s123
      %p135 = scmp.eq.s32.totalorder %s29, 1
      %p136 = por %p134, %p135
      %p138 = scmp.ne.s32.totalorder %s123, %s137
      %p139 = scmp.eq.s32.totalorder %s29, 0
      %p140 = por %p138, %p139
      %s141 = ssub.s32 %s23, %s30
      %p142 = scmp.eq.s32.totalorder %s141, 0
      %s144 = sadd.s32 %s143, 1
      %s145 = scalar_select %p142, %s143, %s144
      %p148 = pneg %p142
      %p149 = scmp.eq.s32.totalorder %s23, 1
      %p150 = por %p148, %p149
      %p151 = scmp.ne.s32.totalorder %s143, %s146
      %p152 = scmp.eq.s32.totalorder %s23, 0
      %p153 = por %p151, %p152
      %p154 = scmp.ne.s32.totalorder %s143, %s146
      %p155 = scmp.eq.s32.totalorder %s28, 1
      %p156 = por %p154, %p155
      %p157 = scmp.ne.s32.totalorder %s146, %s147
      %p158 = scmp.eq.s32.totalorder %s28, 0
      %p159 = por %p157, %p158
      %p160 = scmp.ne.s32.totalorder %s146, %s147
      %p161 = scmp.eq.s32.totalorder %s29, 1
      %p162 = por %p160, %p161
      %p164 = scmp.ne.s32.totalorder %s147, %s163
      %p165 = scmp.eq.s32.totalorder %s29, 0
      %p166 = por %p164, %p165
      %s167 = ssub.s32 %s23, %s30
      %p168 = scmp.eq.s32.totalorder %s167, 0
      %s170 = sadd.s32 %s169, 1
      %s171 = scalar_select %p168, %s169, %s170
      %p174 = pneg %p168
      %p175 = scmp.eq.s32.totalorder %s23, 1
      %p176 = por %p174, %p175
      %p177 = scmp.ne.s32.totalorder %s169, %s172
      %p178 = scmp.eq.s32.totalorder %s23, 0
      %p179 = por %p177, %p178
      %p180 = scmp.ne.s32.totalorder %s169, %s172
      %p181 = scmp.eq.s32.totalorder %s28, 1
      %p182 = por %p180, %p181
      %p183 = scmp.ne.s32.totalorder %s172, %s173
      %p184 = scmp.eq.s32.totalorder %s28, 0
      %p185 = por %p183, %p184
      %p186 = scmp.ne.s32.totalorder %s172, %s173
      %p187 = scmp.eq.s32.totalorder %s29, 1
      %p188 = por %p186, %p187
      %p190 = scmp.ne.s32.totalorder %s173, %s189
      %p191 = scmp.eq.s32.totalorder %s29, 0
      %p192 = por %p190, %p191
      %p193 = scmp.le.s32.totalorder 1, %s23
      %p194 = scmp.lt.s32.totalorder %s23, 3
      %p195 = pnand %p193, %p194
      %p196 = pneg %p195
      // Predicated region
      $region9: #{tpu_custom_call.1} parent=5 // pred_check
        _
      $region10: #{tpu_custom_call.1} parent=5 // pred_check_branch
        %198 = sbr.rel (%p195) target = $region12
      $region11: #{tpu_custom_call.1} parent=5 // pred_region
        %s199 = ssub.s32 %s23, 1
        // Predicated region
        $region13: #{tpu_custom_call.1} parent=11 // pred_check
          %p200 = pneg %p70
        $region14: #{tpu_custom_call.1} parent=11 // pred_check_branch
          %202 = sbr.rel (%p200) target = $region16
        $region15: #{tpu_custom_call.1} parent=11 // pred_region
          %204 = vsyncadd [#allocation6], 0
          %s205 = sshll.u32 %s1, 4
          %s206 = int_to_ptr.hbm [resolvable:$true] %s205
          %s207 = sshll.u32 [#allocation5], 4
          %s208 = int_to_ptr.vmem [resolvable:$true] %s207
          %213 = dma.hbm_to_vmem [thread:$0]  %s206, 512, %s208, [#allocation6], 128, 128, 8
        $region16: #{tpu_custom_call.1} parent=11 // pred_fallthru
          _
        // Predicated region
        $region17: #{tpu_custom_call.1} parent=11 // pred_check
          %p214 = pneg %p91
        $region18: #{tpu_custom_call.1} parent=11 // pred_check_branch
          %216 = sbr.rel (%p214) target = $region20
        $region19: #{tpu_custom_call.1} parent=11 // pred_region
          _
        $region20: #{tpu_custom_call.1} parent=11 // pred_fallthru
          _
        // Predicated region
        $region21: #{tpu_custom_call.1} parent=11 // pred_check
          %p217 = pneg %p112
        $region22: #{tpu_custom_call.1} parent=11 // pred_check_branch
          %219 = sbr.rel (%p217) target = $region24
        $region23: #{tpu_custom_call.1} parent=11 // pred_region
          %221 = vsyncadd [#allocation6], 0
          %s222 = sshll.u32 %s3, 4
          %s223 = int_to_ptr.hbm [resolvable:$true] %s222
          %s224 = sshll.u32 [#allocation7], 4
          %s225 = int_to_ptr.vmem [resolvable:$true] %s224
          %230 = dma.hbm_to_vmem [thread:$0]  %s223, 1024, %s225, [#allocation6], 128, 128, 8
        $region24: #{tpu_custom_call.1} parent=11 // pred_fallthru
          _
        // Predicated region
        $region25: #{tpu_custom_call.1} parent=11 // pred_check
          %p231 = pneg %p133
        $region26: #{tpu_custom_call.1} parent=11 // pred_check_branch
          %233 = sbr.rel (%p231) target = $region28
        $region27: #{tpu_custom_call.1} parent=11 // pred_region
          _
        $region28: #{tpu_custom_call.1} parent=11 // pred_fallthru
          _
      $region12: #{tpu_custom_call.1} parent=5 // pred_fallthru
        _
      %p234 = scmp.lt.s32.totalorder %s23, 2
      // Predicated region
      $region29: #{tpu_custom_call.1} parent=5 // pred_check
        %p235 = pneg %p234
      $region30: #{tpu_custom_call.1} parent=5 // pred_check_branch
        %237 = sbr.rel (%p235) target = $region32
      $region31: #{tpu_custom_call.1} parent=5 // pred_region
        // Predicated region
        $region33: #{tpu_custom_call.1} parent=31 // pred_check
          %p238 = pneg %p43
        $region34: #{tpu_custom_call.1} parent=31 // pred_check_branch
          %240 = sbr.rel (%p238) target = $region36
        $region35: #{tpu_custom_call.1} parent=31 // pred_region
          %s241 = sand.u32 %s33, 1
          %s242 = scalar_lea.sflag [#allocation3], %s241
          %s243 = sand.u32 %s33, 1
          %s244 = smul.addr %s243, 224
          %s245 = scalar_lea.vmem [#allocation2], %s244
          %247 = vsyncadd %s242, 0
          %s248 = smul.addr %s23, 28
          %s249 = smul.addr %s248, 8
          %s250 = scalar_lea.hbm %s0, %s249
          %s251 = sshll.u32 %s250, 4
          %s252 = int_to_ptr.hbm [resolvable:$true] %s251
          %s253 = sshll.u32 %s245, 4
          %s254 = int_to_ptr.vmem [resolvable:$true] %s253
          %259 = dma.hbm_to_vmem [thread:$0]  %s252, 3584, %s254, %s242, 896, 896, 56
        $region36: #{tpu_custom_call.1} parent=31 // pred_fallthru
          _
      $region32: #{tpu_custom_call.1} parent=5 // pred_fallthru
        _
      %p260 = scmp.le.s32.totalorder 1, %s23
      %p261 = scmp.lt.s32.totalorder %s23, 3
      %p262 = pnand %p260, %p261
      %p263 = pneg %p262
      // Predicated region
      $region37: #{tpu_custom_call.1} parent=5 // pred_check
        _
      $region38: #{tpu_custom_call.1} parent=5 // pred_check_branch
        %265 = sbr.rel (%p262) target = $region40
      $region39: #{tpu_custom_call.1} parent=5 // pred_region
        %s266 = ssub.s32 %s23, 1
        %s267 = sand.u32 %s36, 1
        %s268 = scalar_lea.sflag [#allocation3], %s267
        %s269 = sand.u32 %s36, 1
        %s270 = smul.addr %s269, 224
        %s271 = scalar_lea.vmem [#allocation2], %s270
        // Predicated region
        $region41: #{tpu_custom_call.1} parent=39 // pred_check
          %p272 = pneg %p49
        $region42: #{tpu_custom_call.1} parent=39 // pred_check_branch
          %274 = sbr.rel (%p272) target = $region44
        $region43: #{tpu_custom_call.1} parent=39 // pred_region
          %276 = dma.done %s268, 3584
        $region44: #{tpu_custom_call.1} parent=39 // pred_fallthru
          _
        // Predicated region
        $region45: #{tpu_custom_call.1} parent=39 // pred_check
          %p277 = pneg %p70
        $region46: #{tpu_custom_call.1} parent=39 // pred_check_branch
          %279 = sbr.rel (%p277) target = $region48
        $region47: #{tpu_custom_call.1} parent=39 // pred_region
          %281 = dma.done [#allocation6], 512
        $region48: #{tpu_custom_call.1} parent=39 // pred_fallthru
          _
        // Predicated region
        $region49: #{tpu_custom_call.1} parent=39 // pred_check
          %p282 = pneg %p112
        $region50: #{tpu_custom_call.1} parent=39 // pred_check_branch
          %284 = sbr.rel (%p282) target = $region52
        $region51: #{tpu_custom_call.1} parent=39 // pred_region
          %286 = dma.done [#allocation6], 1024
        $region52: #{tpu_custom_call.1} parent=39 // pred_fallthru
          _
        %s287 = sand.u32 %s36, 1
        %s288 = scalar_lea.sflag [#allocation3], %s287
        %s289 = sand.u32 %s36, 1
        %s290 = smul.addr %s289, 224
        %s291 = scalar_lea.vmem [#allocation2], %s290
        %p292 = pneg %p49
        %p293 = pneg %p46
        %p294 = pneg %p70
        %p295 = pneg %p67
        %p296 = pneg %p91
        %p297 = pneg %p88
        %p298 = pneg %p112
        %p299 = pneg %p109
        %p300 = pneg %p133
        %p301 = pneg %p130
        %p302 = pneg %p159
        %p303 = pneg %p156
        %s304 = sand.u32 %s146, 1
        %s305 = scalar_lea.sflag [#allocation4], %s304
        %s306 = sand.u32 %s146, 1
        %s307 = scalar_lea.vmem [#allocation8], %s306
        %p308 = pneg %p185
        %p309 = pneg %p182
        %s310 = sand.u32 %s172, 1
        %s311 = scalar_lea.sflag [#allocation10], %s310
        %s312 = sand.u32 %s172, 1
        %s313 = smul.addr %s312, 28
        %s314 = scalar_lea.vmem [#allocation9], %s313
        %v315 = vld [vmem:[%s271] sm:$0xff]
        %v316 = vld [vmem:[%s271 + $0x8] sm:$0xff]
        %v317 = vld [vmem:[%s271 + $0x10] sm:$0xff]
        %v318 = vld [vmem:[%s271 + $0x18] sm:$0xff]
        %v319 = vld [vmem:[%s271 + $0x20] sm:$0xff]
        %v320 = vld [vmem:[%s271 + $0x28] sm:$0xff]
        %v321 = vld [vmem:[%s271 + $0x30] sm:$0xff]
        %v322 = vld [vmem:[%s271 + $0x38] sm:$0xff]
        %v323 = vld [vmem:[%s271 + $0x40] sm:$0xff]
        %v324 = vld [vmem:[%s271 + $0x48] sm:$0xff]
        %v325 = vld [vmem:[%s271 + $0x50] sm:$0xff]
        %v326 = vld [vmem:[%s271 + $0x58] sm:$0xff]
        %v327 = vld [vmem:[%s271 + $0x60] sm:$0xff]
        %v328 = vld [vmem:[%s271 + $0x68] sm:$0xff]
        %v329 = vld [vmem:[%s271 + $0x70] sm:$0xff]
        %v330 = vld [vmem:[%s271 + $0x78] sm:$0xff]
        %v331 = vld [vmem:[%s271 + $0x80] sm:$0xff]
        %v332 = vld [vmem:[%s271 + $0x88] sm:$0xff]
        %v333 = vld [vmem:[%s271 + $0x90] sm:$0xff]
        %v334 = vld [vmem:[%s271 + $0x98] sm:$0xff]
        %v335 = vld [vmem:[%s271 + $0xa0] sm:$0xff]
        %v336 = vld [vmem:[%s271 + $0xa8] sm:$0xff]
        %v337 = vld [vmem:[%s271 + $0xb0] sm:$0xff]
        %v338 = vld [vmem:[%s271 + $0xb8] sm:$0xff]
        %v339 = vld [vmem:[%s271 + $0xc0] sm:$0xff]
        %v340 = vld [vmem:[%s271 + $0xc8] sm:$0xff]
        %v341 = vld [vmem:[%s271 + $0xd0] sm:$0xff]
        %v342 = vld [vmem:[%s271 + $0xd8] sm:$0xff]
        %v343 = vadd.f32 %v315, %v316
        %v344 = vadd.f32 %v343, %v317
        %v345 = vadd.f32 %v344, %v318
        %v346 = vadd.f32 %v345, %v319
        %v347 = vadd.f32 %v346, %v320
        %vm348 = vcmask 1006592
        %v349 = vsel %vm348, %v321, 0.0
        %v350 = vadd.f32 %v347, %v349
        %351 = vadd.xlane.f32.xlu0 %v350
        %v352 = vpop.xlane.xlu0 %351
        %v353 = vadd.f32 %v322, %v323
        %v354 = vadd.f32 %v353, %v324
        %v355 = vadd.f32 %v354, %v325
        %v356 = vadd.f32 %v355, %v326
        %v357 = vadd.f32 %v356, %v327
        %v358 = vsel %vm348, %v328, 0.0
        %v359 = vadd.f32 %v357, %v358
        %360 = vadd.xlane.f32.xlu0 %v359
        %v361 = vpop.xlane.xlu0 %360
        %v362 = vadd.f32 %v329, %v330
        %v363 = vadd.f32 %v362, %v331
        %v364 = vadd.f32 %v363, %v332
        %v365 = vadd.f32 %v364, %v333
        %v366 = vadd.f32 %v365, %v334
        %v367 = vsel %vm348, %v335, 0.0
        %v368 = vadd.f32 %v366, %v367
        %369 = vadd.xlane.f32.xlu0 %v368
        %v370 = vpop.xlane.xlu0 %369
        %v371 = vadd.f32 %v336, %v337
        %v372 = vadd.f32 %v371, %v338
        %v373 = vadd.f32 %v372, %v339
        %v374 = vadd.f32 %v373, %v340
        %v375 = vadd.f32 %v374, %v341
        %v376 = vsel %vm348, %v342, 0.0
        %v377 = vadd.f32 %v375, %v376
        %378 = vadd.xlane.f32.xlu0 %v377
        %v379 = vpop.xlane.xlu0 %378
        %v380 = vmul.f32 %v352, 0.0011223345
        %v381 = vmul.f32 %v361, 0.0011223345
        %v382 = vmul.f32 %v370, 0.0011223345
        %v383 = vmul.f32 %v379, 0.0011223345
        %v384 = vld [vmem:[#allocation5] sm:$0xff]
        %v385 = vld [vmem:[#allocation5 + $0x8] sm:$0xff]
        %v386 = vld [vmem:[#allocation5 + $0x10] sm:$0xff]
        %v387 = vld [vmem:[#allocation5 + $0x18] sm:$0xff]
        %v388 = vld [vmem:[%s2] sm:$0x1]
        %v393 = vlaneseq
        %v394 = vand.u32 %v393, 127
        %v395 = vperm.slane %v380, %v394
        %v396 = vadd.s32 %v394, 4294967288
        %v397 = vperm.slane %v381, %v396
        %vm398 = vcmask 130112
        %v399 = vsel %vm398, %v397, %v395
        %v400 = vadd.s32 %v394, 4294967280
        %v401 = vperm.slane %v382, %v400
        %vm402 = vcmask 195712
        %v403 = vsel %vm402, %v401, %v399
        %v404 = vadd.s32 %v394, 4294967272
        %v405 = vperm.slane %v383, %v404
        %vm406 = vcmask 261312
        %v407 = vsel %vm406, %v405, %v403
        %vm408 = vcmask 261120
        %v409 = vsel %vm408, %v407, 0
        %411 = vmatpush.msra.mxu0 0.0
        %412 = vmatpush.msra.mxu0 0.0
        %413 = vmatpush.msra.mxu0 0.0
        %414 = vmatpush.msra.mxu0 0.0
        %415 = vmatpush.msra.mxu0 0.0
        %416 = vmatpush.msra.mxu0 0.0
        %417 = vmatpush.msra.mxu0 0.0
        %418 = vmatpush.msra.mxu0 0.0
        %419 = vmatpush.msra.mxu0 0.0
        %420 = vmatpush.msra.mxu0 0.0
        %421 = vmatpush.msra.mxu0 0.0
        %422 = vmatpush.msra.mxu0 0.0
        %423 = vmatpush.msra.mxu0 %v387
        %424 = vmatpush.msra.mxu0 %v386
        %425 = vmatpush.msra.mxu0 %v385
        %426 = vmatpush.msra.mxu0 %v384
        %427 = vmatmul.f32.gmra.mxu0 %v409
        %v428 = vpop.f32.mrf.mxu0
        %v429 = vadd.f32 %v388, %v428
        %430 = vdwg.mxu0
        %v431 = vxor.u32 %v429, 2147483648
        %v432 = vmul.f32 %v431, 1.442695
        %v433 = vpow.pop %v432
        %v434 = vadd.f32 %v433, 1.0
        %v435 = vrcp.pop %v434
        %v436 = vmul.f32 %v434, %v435
        %v437 = vsub.f32 1.0, %v436
        %v438 = vmul.f32 %v435, %v437
        %v439 = vadd.f32 %v435, %v438
        %vm440 = vweird.f32 %v434
        %vm441 = vweird.f32 %v435
        %vm442 = vmor %vm440, %vm441
        %v443 = vsel %vm442, %v435, %v439
        %v444 = vand.u32 2147483647, %v434
        %vm445 = vcmp.eq.f32.partialorder %v444, 8.507059e+37
        %v446 = vand.u32 %v434, 2147483648
        %v447 = vor.u32 1.1754944e-38, %v446
        %v448 = vsel %vm445, %v447, %v443
        %v449 = vmul.f32 1.0, %v448
        %v450 = vld [vmem:[#allocation7] sm:$0xff]
        %v451 = vld [vmem:[#allocation7 + $0x8] sm:$0xff]
        %v452 = vld [vmem:[#allocation7 + $0x10] sm:$0xff]
        %v453 = vld [vmem:[#allocation7 + $0x18] sm:$0xff]
        %v454 = vld [vmem:[#allocation7 + $0x20] sm:$0xff]
        %v455 = vld [vmem:[#allocation7 + $0x28] sm:$0xff]
        %v456 = vld [vmem:[#allocation7 + $0x30] sm:$0xff]
        %v457 = vld [vmem:[#allocation7 + $0x38] sm:$0xff]
        %v458 = vld [vmem:[%s4] sm:$0x1]
        %vm459 = vcmask 523264
        %v461 = vsel %vm459, %v449, 0
        %463 = vmatpush.msra.mxu0 0.0
        %464 = vmatpush.msra.mxu0 0.0
        %465 = vmatpush.msra.mxu0 0.0
        %466 = vmatpush.msra.mxu0 0.0
        %467 = vmatpush.msra.mxu0 0.0
        %468 = vmatpush.msra.mxu0 0.0
        %469 = vmatpush.msra.mxu0 0.0
        %470 = vmatpush.msra.mxu0 0.0
        %471 = vmatpush.msra.mxu0 %v457
        %472 = vmatpush.msra.mxu0 %v456
        %473 = vmatpush.msra.mxu0 %v455
        %474 = vmatpush.msra.mxu0 %v454
        %475 = vmatpush.msra.mxu0 %v453
        %476 = vmatpush.msra.mxu0 %v452
        %477 = vmatpush.msra.mxu0 %v451
        %478 = vmatpush.msra.mxu0 %v450
        %479 = vmatmul.f32.gmra.mxu0 %v461
        %v480 = vpop.f32.mrf.mxu0
        %v481 = vadd.f32 %v458, %v480
        %482 = vdwg.mxu0
        %v483 = vxor.u32 %v481, 2147483648
        %v484 = vmul.f32 %v483, 1.442695
        %v485 = vpow.pop %v484
        %v486 = vadd.f32 %v485, 1.0
        %v487 = vrcp.pop %v486
        %v488 = vmul.f32 %v486, %v487
        %v489 = vsub.f32 1.0, %v488
        %v490 = vmul.f32 %v487, %v489
        %v491 = vadd.f32 %v487, %v490
        %vm492 = vweird.f32 %v486
        %vm493 = vweird.f32 %v487
        %vm494 = vmor %vm492, %vm493
        %v495 = vsel %vm494, %v487, %v491
        %v496 = vand.u32 2147483647, %v486
        %vm497 = vcmp.eq.f32.partialorder %v496, 8.507059e+37
        %v498 = vand.u32 %v486, 2147483648
        %v499 = vor.u32 1.1754944e-38, %v498
        %v500 = vsel %vm497, %v499, %v495
        %v501 = vmul.f32 1.0, %v500
        %502 = vst [vmem:[%s307] sm:$0x1] %v501
        %v503 = vmul.f32 %v501, 0.03125
        %v505 = vrot.slane %v503, 7
        %506 = vrot.lane.b32.xlu0 %v505, 96
        %v507 = vpop.permute.xlu0 %506
        %v509 = vrot.slane %v503, 6
        %510 = vrot.lane.b32.xlu0 %v509, 64
        %v511 = vpop.permute.xlu0 %510
        %v513 = vrot.slane %v503, 5
        %514 = vrot.lane.b32.xlu0 %v513, 32
        %v515 = vpop.permute.xlu0 %514
        %vm517 = vcmask 1040384
        %v518 = vsel %vm517, %v503, %v507
        %vm519 = vcmask 1041408
        %v520 = vsel %vm519, %v518, %v511
        %vm521 = vcmask 1042432
        %v522 = vsel %vm521, %v520, %v515
        %v523 = vld [vmem:[%s271] sm:$0xff]
        %v524 = vld [vmem:[%s271 + $0x8] sm:$0xff]
        %v525 = vld [vmem:[%s271 + $0x10] sm:$0xff]
        %v526 = vld [vmem:[%s271 + $0x18] sm:$0xff]
        %v527 = vld [vmem:[%s271 + $0x20] sm:$0xff]
        %v528 = vld [vmem:[%s271 + $0x28] sm:$0xff]
        %v529 = vld [vmem:[%s271 + $0x30] sm:$0xff]
        %v530 = vld [vmem:[%s271 + $0x38] sm:$0xff]
        %v531 = vld [vmem:[%s271 + $0x40] sm:$0xff]
        %v532 = vld [vmem:[%s271 + $0x48] sm:$0xff]
        %v533 = vld [vmem:[%s271 + $0x50] sm:$0xff]
        %v534 = vld [vmem:[%s271 + $0x58] sm:$0xff]
        %v535 = vld [vmem:[%s271 + $0x60] sm:$0xff]
        %v536 = vld [vmem:[%s271 + $0x68] sm:$0xff]
        %v537 = vld [vmem:[%s271 + $0x70] sm:$0xff]
        %v538 = vld [vmem:[%s271 + $0x78] sm:$0xff]
        %v539 = vld [vmem:[%s271 + $0x80] sm:$0xff]
        %v540 = vld [vmem:[%s271 + $0x88] sm:$0xff]
        %v541 = vld [vmem:[%s271 + $0x90] sm:$0xff]
        %v542 = vld [vmem:[%s271 + $0x98] sm:$0xff]
        %v543 = vld [vmem:[%s271 + $0xa0] sm:$0xff]
        %v544 = vld [vmem:[%s271 + $0xa8] sm:$0xff]
        %v545 = vld [vmem:[%s271 + $0xb0] sm:$0xff]
        %v546 = vld [vmem:[%s271 + $0xb8] sm:$0xff]
        %v547 = vld [vmem:[%s271 + $0xc0] sm:$0xff]
        %v548 = vld [vmem:[%s271 + $0xc8] sm:$0xff]
        %v549 = vld [vmem:[%s271 + $0xd0] sm:$0xff]
        %v550 = vld [vmem:[%s271 + $0xd8] sm:$0xff]
        %v552 = vsel %vm408, %v522, 0
        %554 = vmatpush.msra.mxu0 0.0
        %555 = vmatpush.msra.mxu0 0.0
        %556 = vmatpush.msra.mxu0 0.0
        %557 = vmatpush.msra.mxu0 0.0
        %558 = vmatpush.msra.mxu0 0.0
        %559 = vmatpush.msra.mxu0 0.0
        %560 = vmatpush.msra.mxu0 0.0
        %561 = vmatpush.msra.mxu0 0.0
        %562 = vmatpush.msra.mxu0 0.0
        %563 = vmatpush.msra.mxu0 0.0
        %564 = vmatpush.msra.mxu0 0.0
        %565 = vmatpush.msra.mxu0 0.0
        %566 = vmatpush.msra.mxu0 %v544
        %567 = vmatpush.msra.mxu0 %v537
        %568 = vmatpush.msra.mxu0 %v530
        %569 = vmatpush.msra.mxu0 %v523
        %570 = vmatmul.f32.gmra.mxu0 %v552
        %v571 = vpop.f32.mrf.mxu0
        %v572 = vadd.f32 0.0, %v571
        %573 = vdwg.mxu0
        %574 = vmatpush.msra.mxu0 0.0
        %575 = vmatpush.msra.mxu0 0.0
        %576 = vmatpush.msra.mxu0 0.0
        %577 = vmatpush.msra.mxu0 0.0
        %578 = vmatpush.msra.mxu0 0.0
        %579 = vmatpush.msra.mxu0 0.0
        %580 = vmatpush.msra.mxu0 0.0
        %581 = vmatpush.msra.mxu0 0.0
        %582 = vmatpush.msra.mxu0 0.0
        %583 = vmatpush.msra.mxu0 0.0
        %584 = vmatpush.msra.mxu0 0.0
        %585 = vmatpush.msra.mxu0 0.0
        %586 = vmatpush.msra.mxu0 %v545
        %587 = vmatpush.msra.mxu0 %v538
        %588 = vmatpush.msra.mxu0 %v531
        %589 = vmatpush.msra.mxu0 %v524
        %590 = vmatmul.f32.gmra.mxu0 %v552
        %v591 = vpop.f32.mrf.mxu0
        %v592 = vadd.f32 0.0, %v591
        %593 = vdwg.mxu0
        %594 = vmatpush.msra.mxu0 0.0
        %595 = vmatpush.msra.mxu0 0.0
        %596 = vmatpush.msra.mxu0 0.0
        %597 = vmatpush.msra.mxu0 0.0
        %598 = vmatpush.msra.mxu0 0.0
        %599 = vmatpush.msra.mxu0 0.0
        %600 = vmatpush.msra.mxu0 0.0
        %601 = vmatpush.msra.mxu0 0.0
        %602 = vmatpush.msra.mxu0 0.0
        %603 = vmatpush.msra.mxu0 0.0
        %604 = vmatpush.msra.mxu0 0.0
        %605 = vmatpush.msra.mxu0 0.0
        %606 = vmatpush.msra.mxu0 %v546
        %607 = vmatpush.msra.mxu0 %v539
        %608 = vmatpush.msra.mxu0 %v532
        %609 = vmatpush.msra.mxu0 %v525
        %610 = vmatmul.f32.gmra.mxu0 %v552
        %v611 = vpop.f32.mrf.mxu0
        %v612 = vadd.f32 0.0, %v611
        %613 = vdwg.mxu0
        %614 = vmatpush.msra.mxu0 0.0
        %615 = vmatpush.msra.mxu0 0.0
        %616 = vmatpush.msra.mxu0 0.0
        %617 = vmatpush.msra.mxu0 0.0
        %618 = vmatpush.msra.mxu0 0.0
        %619 = vmatpush.msra.mxu0 0.0
        %620 = vmatpush.msra.mxu0 0.0
        %621 = vmatpush.msra.mxu0 0.0
        %622 = vmatpush.msra.mxu0 0.0
        %623 = vmatpush.msra.mxu0 0.0
        %624 = vmatpush.msra.mxu0 0.0
        %625 = vmatpush.msra.mxu0 0.0
        %626 = vmatpush.msra.mxu0 %v547
        %627 = vmatpush.msra.mxu0 %v540
        %628 = vmatpush.msra.mxu0 %v533
        %629 = vmatpush.msra.mxu0 %v526
        %630 = vmatmul.f32.gmra.mxu0 %v552
        %v631 = vpop.f32.mrf.mxu0
        %v632 = vadd.f32 0.0, %v631
        %633 = vdwg.mxu0
        %634 = vmatpush.msra.mxu0 0.0
        %635 = vmatpush.msra.mxu0 0.0
        %636 = vmatpush.msra.mxu0 0.0
        %637 = vmatpush.msra.mxu0 0.0
        %638 = vmatpush.msra.mxu0 0.0
        %639 = vmatpush.msra.mxu0 0.0
        %640 = vmatpush.msra.mxu0 0.0
        %641 = vmatpush.msra.mxu0 0.0
        %642 = vmatpush.msra.mxu0 0.0
        %643 = vmatpush.msra.mxu0 0.0
        %644 = vmatpush.msra.mxu0 0.0
        %645 = vmatpush.msra.mxu0 0.0
        %646 = vmatpush.msra.mxu0 %v548
        %647 = vmatpush.msra.mxu0 %v541
        %648 = vmatpush.msra.mxu0 %v534
        %649 = vmatpush.msra.mxu0 %v527
        %650 = vmatmul.f32.gmra.mxu0 %v552
        %v651 = vpop.f32.mrf.mxu0
        %v652 = vadd.f32 0.0, %v651
        %653 = vdwg.mxu0
        %654 = vmatpush.msra.mxu0 0.0
        %655 = vmatpush.msra.mxu0 0.0
        %656 = vmatpush.msra.mxu0 0.0
        %657 = vmatpush.msra.mxu0 0.0
        %658 = vmatpush.msra.mxu0 0.0
        %659 = vmatpush.msra.mxu0 0.0
        %660 = vmatpush.msra.mxu0 0.0
        %661 = vmatpush.msra.mxu0 0.0
        %662 = vmatpush.msra.mxu0 0.0
        %663 = vmatpush.msra.mxu0 0.0
        %664 = vmatpush.msra.mxu0 0.0
        %665 = vmatpush.msra.mxu0 0.0
        %666 = vmatpush.msra.mxu0 %v549
        %667 = vmatpush.msra.mxu0 %v542
        %668 = vmatpush.msra.mxu0 %v535
        %669 = vmatpush.msra.mxu0 %v528
        %670 = vmatmul.f32.gmra.mxu0 %v552
        %v671 = vpop.f32.mrf.mxu0
        %v672 = vadd.f32 0.0, %v671
        %673 = vdwg.mxu0
        %674 = vmatpush.msra.mxu0 0.0
        %675 = vmatpush.msra.mxu0 0.0
        %676 = vmatpush.msra.mxu0 0.0
        %677 = vmatpush.msra.mxu0 0.0
        %678 = vmatpush.msra.mxu0 0.0
        %679 = vmatpush.msra.mxu0 0.0
        %680 = vmatpush.msra.mxu0 0.0
        %681 = vmatpush.msra.mxu0 0.0
        %682 = vmatpush.msra.mxu0 0.0
        %683 = vmatpush.msra.mxu0 0.0
        %684 = vmatpush.msra.mxu0 0.0
        %685 = vmatpush.msra.mxu0 0.0
        %686 = vmatpush.msra.mxu0 %v550
        %687 = vmatpush.msra.mxu0 %v543
        %688 = vmatpush.msra.mxu0 %v536
        %689 = vmatpush.msra.mxu0 %v529
        %690 = vmatmul.f32.gmra.mxu0 %v552
        %v691 = vpop.f32.mrf.mxu0
        %v692 = vadd.f32 0.0, %v691
        %693 = vdwg.mxu0
        %v700 = vrot.slane %v592, 4
        %v701 = vrot.slane %v632, 4
        %v702 = vrot.slane %v672, 4
        %vm703 = vcmask 1043456
        %v704 = vsel %vm703, %v572, %v700
        %v705 = vsel %vm703, %v612, %v701
        %v706 = vsel %vm703, %v652, %v702
        %710 = vst [vmem:[%s314] sm:$0xff] %v704
        %711 = vst [vmem:[%s314 + $0x8] sm:$0xff] %v705
        %712 = vst [vmem:[%s314 + $0x10] sm:$0xff] %v706
        %vm713 = vcmask 1002496
        %714 = vst.msk [vmem:[%s314 + $0x18] sm:$0xf] %vm713, %v692
        %s715 = sand.u32 %s146, 1
        %s716 = scalar_lea.sflag [#allocation4], %s715
        %s717 = sand.u32 %s146, 1
        %s718 = scalar_lea.vmem [#allocation8], %s717
        %s719 = sand.u32 %s172, 1
        %s720 = scalar_lea.sflag [#allocation10], %s719
        %s721 = sand.u32 %s172, 1
        %s722 = smul.addr %s721, 28
        %s723 = scalar_lea.vmem [#allocation9], %s722
        // Predicated region
        $region53: #{tpu_custom_call.1} parent=39 // pred_check
          %p724 = pneg %p156
        $region54: #{tpu_custom_call.1} parent=39 // pred_check_branch
          %726 = sbr.rel (%p724) target = $region56
        $region55: #{tpu_custom_call.1} parent=39 // pred_region
          %728 = vsyncadd %s716, 0
          %s729 = scalar_lea.hbm %s5, %s28
          %s731 = sshll.u32 %s718, 4
          %s732 = int_to_ptr.vmem [resolvable:$true] %s731
          %s733 = sshll.u32 %s729, 4
          %s734 = int_to_ptr.hbm [resolvable:$true] %s733
          %736 = dma.vmem_to_hbm [thread:$0]  %s732, 16, %s734, %s716
        $region56: #{tpu_custom_call.1} parent=39 // pred_fallthru
          _
        // Predicated region
        $region57: #{tpu_custom_call.1} parent=39 // pred_check
          %p737 = pneg %p182
        $region58: #{tpu_custom_call.1} parent=39 // pred_check_branch
          %739 = sbr.rel (%p737) target = $region60
        $region59: #{tpu_custom_call.1} parent=39 // pred_region
          %741 = vsyncadd %s720, 0
          %s742 = smul.addr %s28, 7
          %s743 = smul.addr %s742, 4
          %s744 = scalar_lea.hbm %s6, %s743
          %s746 = sshll.u32 %s723, 4
          %s747 = int_to_ptr.vmem [resolvable:$true] %s746
          %s748 = sshll.u32 %s744, 4
          %s749 = int_to_ptr.hbm [resolvable:$true] %s748
          %751 = dma.vmem_to_hbm [thread:$0]  %s747, 448, %s749, %s720
        $region60: #{tpu_custom_call.1} parent=39 // pred_fallthru
          _
      $region40: #{tpu_custom_call.1} parent=5 // pred_fallthru
        _
      %p752 = scmp.le.s32.totalorder 2, %s23
      // Predicated region
      $region61: #{tpu_custom_call.1} parent=5 // pred_check
        %p753 = pneg %p752
      $region62: #{tpu_custom_call.1} parent=5 // pred_check_branch
        %755 = sbr.rel (%p753) target = $region64
      $region63: #{tpu_custom_call.1} parent=5 // pred_region
        %s756 = ssub.s32 %s23, 2
        // Predicated region
        $region65: #{tpu_custom_call.1} parent=63 // pred_check
          %p757 = pneg %p162
        $region66: #{tpu_custom_call.1} parent=63 // pred_check_branch
          %759 = sbr.rel (%p757) target = $region68
        $region67: #{tpu_custom_call.1} parent=63 // pred_region
          %s760 = sand.u32 %s147, 1
          %s761 = scalar_lea.sflag [#allocation4], %s760
          %s762 = sand.u32 %s147, 1
          %s763 = scalar_lea.vmem [#allocation8], %s762
          %765 = dma.done %s761, 16
        $region68: #{tpu_custom_call.1} parent=63 // pred_fallthru
          _
        // Predicated region
        $region69: #{tpu_custom_call.1} parent=63 // pred_check
          %p766 = pneg %p188
        $region70: #{tpu_custom_call.1} parent=63 // pred_check_branch
          %768 = sbr.rel (%p766) target = $region72
        $region71: #{tpu_custom_call.1} parent=63 // pred_region
          %s769 = sand.u32 %s173, 1
          %s770 = scalar_lea.sflag [#allocation10], %s769
          %s771 = sand.u32 %s173, 1
          %s772 = smul.addr %s771, 28
          %s773 = scalar_lea.vmem [#allocation9], %s772
          %775 = dma.done %s770, 448
        $region72: #{tpu_custom_call.1} parent=63 // pred_fallthru
          _
      $region64: #{tpu_custom_call.1} parent=5 // pred_fallthru
        _
    $region6: #{tpu_custom_call.1} parent=1 // loop_footer
      %s27 = sadd.s32 1, %s23
    $region7: #{tpu_custom_call.1} parent=1 // loop_footer_branch
      %22 = sbr.rel target = $region3
    $region8: #{tpu_custom_call.1} parent=1 // loop_exit
      _
    %776 = vsyncpa [#allocation3], 1
    %s777 = scalar_lea.sflag [#allocation3], 1
    %778 = vsyncpa %s777, 1
    %779 = vsyncpa [#allocation6], 1
    %780 = vsyncpa [#allocation4], 1
    %s781 = scalar_lea.sflag [#allocation4], 1
    %782 = vsyncpa %s781, 1
    %783 = vsyncpa [#allocation10], 1
    %s784 = scalar_lea.sflag [#allocation10], 1
    %785 = vsyncpa %s784, 1

</llo_original>
